<compile_context>
chip_gen: v6e
topology: v6e:2x2x1
jax: 0.10.0
libtpu: 0.0.40
codegen_flags: <defaults>
</compile_context>

<pallas_src>
import functools
import math

import numpy as np
import jax
import jax.numpy as jnp
from jax.experimental import pallas as pl
from jax.experimental.pallas import tpu as pltpu

NUM_SUBSET = 3
LEAKY_SLOPE = 0.1
BN_EPS = 1e-5
_F32 = jnp.float32
_BF16 = jnp.bfloat16


# --------------------------------------------------------------------------- #
# VMEM sizing helpers (lane/sublane-padding aware)
# --------------------------------------------------------------------------- #
def _phys_block_bytes(shape, dtype):
    """Physical VMEM bytes of one block: minor dim rounded to 128 lanes,
    second-minor rounded to the native sublane tile (8 for 32-bit, 16 for
    16-bit packed dtypes)."""
    itemsize = int(np.dtype(dtype).itemsize)
    sub = 8 * (4 // itemsize)
    shape = tuple(int(d) for d in shape)
    if len(shape) == 1:
        shape = (1,) + shape
    lead = int(np.prod(shape[:-2], dtype=np.int64)) if len(shape) > 2 else 1
    r, c = shape[-2], shape[-1]
    rp = -(-r // sub) * sub
    cp = -(-c // 128) * 128
    return int(lead * rp * cp * itemsize)


def _vmem_limit_and_budget():
    """Explicit scoped-VMEM limit (~75% of physical, capped) and the slab
    budget we size batch blocks against (leaves headroom for compiler
    scratch)."""
    try:
        phys = int(pltpu.get_tpu_info().vmem_capacity_bytes)
    except Exception:
        phys = 64 * 1024 * 1024          # conservative: v7x per-TensorCore VMEM
    limit = int(min(phys * 3 // 4, 100 * 1024 * 1024))
    budget = int(limit * 0.8)
    return limit, budget


def _pick_b_blk(N, per_b_bytes, const_bytes, budget, max_unroll=16):
    """Batch elements per grid step: fill the budget with double-buffered
    slabs, bound the static unroll, and keep >=2 grid steps when possible so
    both v7x TensorCores (megacore) get work."""
    avail = budget - 2 * const_bytes
    b = max(1, int(avail // max(1, 2 * per_b_bytes)))
    b = min(b, int(N), max_unroll)
    if N >= 2:
        b = min(b, -(-N // 2))           # ceil(N/2): at least 2 grid steps
    return max(1, b)


# --------------------------------------------------------------------------- #
# Kernel 1: 1x1-conv projections (q / fused kv), layout (C, T*Vp)
# --------------------------------------------------------------------------- #
def _proj_kernel(x1_ref, x2_ref, wq_ref, bq_ref, wkv_ref, bkv_ref, vmask_ref,
                 q_ref, kv_ref, *, B_blk):
    wq = wq_ref[...]                     # (C, C)  bf16, already scaled by 1/(mid*T)
    bq = bq_ref[...]                     # (C, 1)  f32,  already scaled
    wkv = wkv_ref[...]                   # (2C, C) bf16
    bkv = bkv_ref[...]                   # (2C, 1) f32
    vmask = vmask_ref[...]               # (1, T*Vp) f32, zeros on padded joints
    for b in range(B_blk):               # static unroll over the batch block
        x1 = x1_ref[b].astype(_BF16)     # (C, T*Vp)
        x2 = x2_ref[b].astype(_BF16)
        q = jnp.dot(wq, x1, preferred_element_type=jnp.float32) + bq
        kv = jnp.dot(wkv, x2, preferred_element_type=jnp.float32) + bkv
        q_ref[b] = q.astype(_BF16)
        # masking kv zeroes the padded joint lanes of both k and v; only v
        # needs it for correctness, masking k as well is harmless.
        kv_ref[b] = (kv * vmask).astype(_BF16)


# --------------------------------------------------------------------------- #
# Kernel 2: per-subset attention, layout (mid*T, Vp); grid = (batch, subset)
# --------------------------------------------------------------------------- #
def _attn_kernel(q_ref, k_ref, v_ref, y_ref, *, B_blk):
    for b in range(B_blk):
        qs = q_ref[b, 0]                 # (mid*T, Vp) bf16 (1/(mid*T) folded in)
        ks = k_ref[b, 0]
        vs = v_ref[b, 0]
        # logits[u, w] = sum_{c,t} q[(c,t),u] * k[(c,t),w]   (one MXU matmul)
        logits = jax.lax.dot_general(
            qs, ks, (((0,), (0,)), ((), ())),
            preferred_element_type=jnp.float32)              # (Vp, Vp) f32
        attn = jnp.tanh(logits).astype(_BF16)
        # y[(c,t), u] = sum_w v[(c,t), w] * attn[u, w]        (one MXU matmul)
        y_ref[b, 0] = jax.lax.dot_general(
            vs, attn, (((1,), (1,)), ((), ())),
            preferred_element_type=jnp.float32).astype(_BF16)  # (mid*T, Vp)


# --------------------------------------------------------------------------- #
# Kernel 3: ff 1x1-conv + eval BatchNorm + residual + LeakyReLU, layout (C, T*Vp)
# --------------------------------------------------------------------------- #
def _ffn_kernel(y_ref, x1_ref, wff_ref, bff_ref, scale_ref, shift_ref, o_ref, *,
                B_blk):
    wff = wff_ref[...]                   # (C, C) bf16
    bff = bff_ref[...]                   # (C, 1) f32
    scale = scale_ref[...]
    shift = shift_ref[...]
    for b in range(B_blk):
        z = jnp.dot(wff, y_ref[b], preferred_element_type=jnp.float32) + bff
        z = z * scale + shift
        z = x1_ref[b].astype(jnp.float32) + z
        o_ref[b] = jnp.maximum(z, LEAKY_SLOPE * z)


# --------------------------------------------------------------------------- #
# Wrapper
# --------------------------------------------------------------------------- #
def spatial_inter_attention(x1, x2, params, num_subset=NUM_SUBSET):
    N, C, T, V = x1.shape
    S = num_subset
    assert C % S == 0, "in_channels must be divisible by num_subset"
    mid = C // S
    inv_norm = 1.0 / float(mid * T)

    # ---- lane-dense padding of V so T*Vp is a multiple of 128 ----------------
    lane_mult = 128 // math.gcd(T, 128)
    Vp = -(-V // lane_mult) * lane_mult
    if Vp > 2 * V:                 # don't pay >2x padded work just for dense vst
        Vp = V
    v_pad = Vp - V
    TVp = T * Vp
    CT = mid * T

    # ---- inputs ---------------------------------------------------------------
    # No batch padding: ragged last grid block is handled by Pallas.  Pad the V
    # axis only when needed, fused with the bf16 cast into a single HBM pass.
    if v_pad:
        x1f = jnp.pad(x1.astype(_BF16),
                      ((0, 0), (0, 0), (0, 0), (0, v_pad))).reshape(N, C, TVp)
        x2f = jnp.pad(x2.astype(_BF16),
                      ((0, 0), (0, 0), (0, 0), (0, v_pad))).reshape(N, C, TVp)
    else:
        x1f = x1.reshape(N, C, TVp)     # free reshape, keep f32 (residual precision)
        x2f = x2.reshape(N, C, TVp)
    in_dtype = x1f.dtype
    x_item = int(np.dtype(in_dtype).itemsize)

    # lane mask (1 on real joints, 0 on padded ones)
    vmask = ((jnp.arange(TVp, dtype=jnp.int32) % Vp) < V).astype(_F32).reshape(1, TVp)

    # ---- parameters (1/(mid*T) folded into the q projection) -----------------
    wq = (params["wq"] * inv_norm).astype(_BF16)
    bq = (params["bq"] * inv_norm).reshape(C, 1).astype(_F32)
    wkv = params["wkv"].astype(_BF16)
    bkv = params["bkv"].reshape(2 * C, 1).astype(_F32)
    wff = params["wff"].astype(_BF16)
    bff = params["bff"].reshape(C, 1).astype(_F32)
    bn_scale = params["bn_gamma"] / jnp.sqrt(params["bn_var"] + BN_EPS)
    bn_shift = params["bn_beta"] - params["bn_mean"] * bn_scale
    bn_scale = bn_scale.reshape(C, 1).astype(_F32)
    bn_shift = bn_shift.reshape(C, 1).astype(_F32)

    vmem_limit, budget = _vmem_limit_and_budget()

    # ---- kernel 1: projections ------------------------------------------------
    proj_const = (_phys_block_bytes((C, C), _BF16) +
                  _phys_block_bytes((C, 1), _F32) +
                  _phys_block_bytes((2 * C, C), _BF16) +
                  _phys_block_bytes((2 * C, 1), _F32) +
                  _phys_block_bytes((1, TVp), _F32))
    proj_per_b = (2 * _phys_block_bytes((C, TVp), in_dtype) +
                  _phys_block_bytes((C, TVp), _BF16) +
                  _phys_block_bytes((2 * C, TVp), _BF16))
    Bp = _pick_b_blk(N, proj_per_b, proj_const, budget)

    x_spec_p = pl.BlockSpec((Bp, C, TVp), lambda i: (i, 0, 0))
    q, kv = pl.pallas_call(
        functools.partial(_proj_kernel, B_blk=Bp),
        out_shape=(jax.ShapeDtypeStruct((N, C, TVp), _BF16),
                   jax.ShapeDtypeStruct((N, 2 * C, TVp), _BF16)),
        grid=(pl.cdiv(N, Bp),),
        in_specs=[x_spec_p, x_spec_p,
                  pl.BlockSpec((C, C), lambda i: (0, 0)),
                  pl.BlockSpec((C, 1), lambda i: (0, 0)),
                  pl.BlockSpec((2 * C, C), lambda i: (0, 0)),
                  pl.BlockSpec((2 * C, 1), lambda i: (0, 0)),
                  pl.BlockSpec((1, TVp), lambda i: (0, 0))],
        out_specs=(pl.BlockSpec((Bp, C, TVp), lambda i: (i, 0, 0)),
                   pl.BlockSpec((Bp, 2 * C, TVp), lambda i: (i, 0, 0))),
        compiler_params=pltpu.CompilerParams(
            dimension_semantics=("parallel",),
            vmem_limit_bytes=vmem_limit),
        cost_estimate=pl.CostEstimate(
            flops=2 * N * 3 * C * C * TVp,
            transcendentals=0,
            bytes_accessed=N * TVp * C * (2 * x_item + 3 * 2) + 3 * C * C * 2),
    )(x1f, x2f, wq, bq, wkv, bkv, vmask)

    # free row-major HBM reshapes (bitcast-compatible, no copy):
    # (N, C, T*Vp) -> (N, S, mid*T, Vp) and (N, 2C, T*Vp) -> (N, 2S, mid*T, Vp)
    q4 = q.reshape(N, S, CT, Vp)
    kv4 = kv.reshape(N, 2 * S, CT, Vp)

    # ---- kernel 2: attention (grid over batch blocks AND subsets) -------------
    attn_per_b = 4 * _phys_block_bytes((CT, Vp), _BF16)
    Ba = _pick_b_blk(N, attn_per_b, 0, budget)
    y4 = pl.pallas_call(
        functools.partial(_attn_kernel, B_blk=Ba),
        out_shape=jax.ShapeDtypeStruct((N, S, CT, Vp), _BF16),
        grid=(pl.cdiv(N, Ba), S),
        in_specs=[pl.BlockSpec((Ba, 1, CT, Vp), lambda i, s: (i, s, 0, 0)),
                  pl.BlockSpec((Ba, 1, CT, Vp), lambda i, s: (i, s, 0, 0)),
                  pl.BlockSpec((Ba, 1, CT, Vp), lambda i, s: (i, S + s, 0, 0))],
        out_specs=pl.BlockSpec((Ba, 1, CT, Vp), lambda i, s: (i, s, 0, 0)),
        compiler_params=pltpu.CompilerParams(
            dimension_semantics=("parallel", "parallel"),
            vmem_limit_bytes=vmem_limit),
        cost_estimate=pl.CostEstimate(
            flops=4 * N * S * CT * Vp * Vp,
            transcendentals=N * S * Vp * Vp,
            bytes_accessed=4 * N * S * CT * Vp * 2),
    )(q4, kv4, kv4)

    # free reshape back to the conv layout
    y = y4.reshape(N, C, TVp)

    # ---- kernel 3: ffn + BN + residual + LeakyReLU -----------------------------
    ffn_const = (_phys_block_bytes((C, C), _BF16) +
                 3 * _phys_block_bytes((C, 1), _F32))
    ffn_per_b = (_phys_block_bytes((C, TVp), _BF16) +
                 _phys_block_bytes((C, TVp), in_dtype) +
                 _phys_block_bytes((C, TVp), _F32))
    Bf = _pick_b_blk(N, ffn_per_b, ffn_const, budget)

    slab_spec_f = pl.BlockSpec((Bf, C, TVp), lambda i: (i, 0, 0))
    out = pl.pallas_call(
        functools.partial(_ffn_kernel, B_blk=Bf),
        out_shape=jax.ShapeDtypeStruct((N, C, TVp), _F32),
        grid=(pl.cdiv(N, Bf),),
        in_specs=[slab_spec_f, slab_spec_f,
                  pl.BlockSpec((C, C), lambda i: (0, 0)),
                  pl.BlockSpec((C, 1), lambda i: (0, 0)),
                  pl.BlockSpec((C, 1), lambda i: (0, 0)),
                  pl.BlockSpec((C, 1), lambda i: (0, 0))],
        out_specs=slab_spec_f,
        compiler_params=pltpu.CompilerParams(
            dimension_semantics=("parallel",),
            vmem_limit_bytes=vmem_limit),
        cost_estimate=pl.CostEstimate(
            flops=2 * N * C * C * TVp + 5 * N * C * TVp,
            transcendentals=0,
            bytes_accessed=N * C * TVp * (2 + x_item + 4) + C * C * 2),
    )(y, x1f, wff, bff, bn_scale, bn_shift)

    out = out.reshape(N, C, T, Vp)
    if v_pad:
        out = out[:, :, :, :V]
    return out


# --------------------------------------------------------------------------- #
# Pure-JAX reference (eval-mode BatchNorm) and self-test
# --------------------------------------------------------------------------- #
def _reference(x1, x2, params, num_subset=NUM_SUBSET):
    N, C, T, V = x1.shape
    S = num_subset
    mid = C // S
    hp = jax.lax.Precision.HIGHEST

    def conv1x1(x, w, b):
        return jnp.einsum("oc,nctv->notv", w, x, precision=hp) + b[None, :, None, None]

    q = conv1x1(x1, params["wq"], params["bq"]).reshape(N, S, mid, T, V)
    kv = conv1x1(x2, params["wkv"], params["bkv"]).reshape(N, 2 * S, mid, T, V)
    k, v = kv[:, :S], kv[:, S:]
    attn = jnp.tanh(
        jnp.einsum("nsctu,nsctv->nsuv", q, k, precision=hp) / (mid * T))
    y = jnp.einsum("nsuv,nsctv->nsctu", attn, v, precision=hp).reshape(N, C, T, V)
    y = conv1x1(y, params["wff"], params["bff"])
    scale = params["bn_gamma"] / jnp.sqrt(params["bn_var"] + BN_EPS)
    shift = params["bn_beta"] - params["bn_mean"] * scale
    y = y * scale[None, :, None, None] + shift[None, :, None, None]
    z = x1 + y
    return jnp.where(z >= 0, z, LEAKY_SLOPE * z)


if __name__ == "__main__":
    base_key = jax.random.PRNGKey(0)

    def run_case(case_id, N, C, T, V):
        key = jax.random.fold_in(base_key, case_id)
        ks = jax.random.split(key, 12)

        def u(k, shape, fan_in):
            bound = 1.0 / np.sqrt(fan_in)
            return jax.random.uniform(k, shape, jnp.float32, -bound, bound)

        params = {
            "wq": u(ks[0], (C, C), C),
            "bq": u(ks[1], (C,), C),
            "wkv": u(ks[2], (2 * C, C), C),
            "bkv": u(ks[3], (2 * C,), C),
            "wff": u(ks[4], (C, C), C),
            "bff": u(ks[5], (C,), C),
            "bn_gamma": 1.0 + 0.1 * jax.random.normal(ks[6], (C,), jnp.float32),
            "bn_beta": 0.1 * jax.random.normal(ks[7], (C,), jnp.float32),
            "bn_mean": 0.1 * jax.random.normal(ks[8], (C,), jnp.float32),
            "bn_var": 1.0 + 0.1 * jnp.abs(jax.random.normal(ks[9], (C,), jnp.float32)),
        }
        x1 = jax.random.normal(ks[10], (N, C, T, V), jnp.float32)
        x2 = jax.random.normal(ks[11], (N, C, T, V), jnp.float32)

        out = jax.block_until_ready(spatial_inter_attention(x1, x2, params))
        ref = _reference(x1, x2, params)
        # bf16 intermediates (f32 accumulation) -> relaxed tolerance vs the
        # f32/HIGHEST reference.
        np.testing.assert_allclose(np.asarray(out), np.asarray(ref),
                                   rtol=2.5e-2, atol=2.5e-2)

    # lane-aligned case (T*V = 128, no padding, f32 inputs kept), mid_dim = 4
    run_case(0, N=2, C=12, T=8, V=16)
    # exercises V padding (V=10 -> Vp=16) and the bf16-padded input path
    run_case(1, N=10, C=12, T=8, V=10)
    # exercises a ragged last batch block (N=3 with B_blk=2) and mid_dim = 8
    run_case(2, N=3, C=24, T=8, V=16)
    print("KERNEL_OK")
</pallas_src>

<mosaic_0001>
module attributes {stable_mosaic.version = 11 : i64} {
  func.func @_proj_kernel(%arg0: i32, %arg1: memref<1x12x128xf32, #tpu.memory_space<vmem>>, %arg2: memref<1x12x128xf32, #tpu.memory_space<vmem>>, %arg3: memref<12x12xbf16, #tpu.memory_space<vmem>>, %arg4: memref<12x1xf32, #tpu.memory_space<vmem>>, %arg5: memref<24x12xbf16, #tpu.memory_space<vmem>>, %arg6: memref<24x1xf32, #tpu.memory_space<vmem>>, %arg7: memref<1x128xf32, #tpu.memory_space<vmem>>, %arg8: memref<1x12x128xbf16, #tpu.memory_space<vmem>>, %arg9: memref<1x24x128xbf16, #tpu.memory_space<vmem>>) attributes {dimension_semantics = [#tpu.dimension_semantics<parallel>], iteration_bounds = array<i64: 2>, scalar_prefetch = 0 : i64, scratch_operands = 0 : i64, tpu.core_type = #tpu.core_type<tc>, window_params = [{transform_indices = @transform_0, window_bounds = array<i64: 1, 12, 128>}, {transform_indices = @transform_1, window_bounds = array<i64: 1, 12, 128>}, {pipeline_mode = #tpu.pipeline_mode<synchronous>, transform_indices = @transform_2, window_bounds = array<i64: 12, 12>}, {pipeline_mode = #tpu.pipeline_mode<synchronous>, transform_indices = @transform_3, window_bounds = array<i64: 12, 1>}, {pipeline_mode = #tpu.pipeline_mode<synchronous>, transform_indices = @transform_4, window_bounds = array<i64: 24, 12>}, {pipeline_mode = #tpu.pipeline_mode<synchronous>, transform_indices = @transform_5, window_bounds = array<i64: 24, 1>}, {pipeline_mode = #tpu.pipeline_mode<synchronous>, transform_indices = @transform_6, window_bounds = array<i64: 1, 128>}, {transform_indices = @transform_7, window_bounds = array<i64: 1, 12, 128>}, {transform_indices = @transform_8, window_bounds = array<i64: 1, 24, 128>}]} {
    %c0 = arith.constant 0 : index
    %c0_0 = arith.constant 0 : index
    %0 = vector.load %arg3[%c0, %c0_0] : memref<12x12xbf16, #tpu.memory_space<vmem>>, vector<12x12xbf16>
    %c0_1 = arith.constant 0 : index
    %c0_2 = arith.constant 0 : index
    %1 = vector.load %arg4[%c0_1, %c0_2] : memref<12x1xf32, #tpu.memory_space<vmem>>, vector<12x1xf32>
    %c0_3 = arith.constant 0 : index
    %c0_4 = arith.constant 0 : index
    %2 = vector.load %arg5[%c0_3, %c0_4] : memref<24x12xbf16, #tpu.memory_space<vmem>>, vector<24x12xbf16>
    %c0_5 = arith.constant 0 : index
    %c0_6 = arith.constant 0 : index
    %3 = vector.load %arg6[%c0_5, %c0_6] : memref<24x1xf32, #tpu.memory_space<vmem>>, vector<24x1xf32>
    %c0_7 = arith.constant 0 : index
    %c0_8 = arith.constant 0 : index
    %4 = vector.load %arg7[%c0_7, %c0_8] : memref<1x128xf32, #tpu.memory_space<vmem>>, vector<1x128xf32>
    %c0_9 = arith.constant 0 : index
    %c0_10 = arith.constant 0 : index
    %c0_11 = arith.constant 0 : index
    %5 = vector.load %arg1[%c0_9, %c0_10, %c0_11] : memref<1x12x128xf32, #tpu.memory_space<vmem>>, vector<1x12x128xf32>
    %6 = vector.shape_cast %5 : vector<1x12x128xf32> to vector<12x128xf32>
    %7 = arith.truncf %6 : vector<12x128xf32> to vector<12x128xbf16>
    %c0_12 = arith.constant 0 : index
    %c0_13 = arith.constant 0 : index
    %c0_14 = arith.constant 0 : index
    %8 = vector.load %arg2[%c0_12, %c0_13, %c0_14] : memref<1x12x128xf32, #tpu.memory_space<vmem>>, vector<1x12x128xf32>
    %9 = vector.shape_cast %8 : vector<1x12x128xf32> to vector<12x128xf32>
    %10 = arith.truncf %9 : vector<12x128xf32> to vector<12x128xbf16>
    %cst = arith.constant dense<0.000000e+00> : vector<12x128xf32>
    %11 = tpu.matmul %0, %7, %cst {dimension_numbers = #tpu.dot_dimension_numbers<[1], [0], [0], [1], [0, 0, 1, 1], [], []>} : vector<12x12xbf16>, vector<12x128xbf16>, vector<12x128xf32> -> vector<12x128xf32>
    %12 = vector.broadcast %1 : vector<12x1xf32> to vector<12x128xf32>
    %13 = arith.addf %11, %12 : vector<12x128xf32>
    %cst_15 = arith.constant dense<0.000000e+00> : vector<24x128xf32>
    %14 = tpu.matmul %2, %10, %cst_15 {dimension_numbers = #tpu.dot_dimension_numbers<[1], [0], [0], [1], [0, 0, 1, 1], [], []>} : vector<24x12xbf16>, vector<12x128xbf16>, vector<24x128xf32> -> vector<24x128xf32>
    %15 = vector.broadcast %3 : vector<24x1xf32> to vector<24x128xf32>
    %16 = arith.addf %14, %15 : vector<24x128xf32>
    %17 = arith.truncf %13 : vector<12x128xf32> to vector<12x128xbf16>
    %c0_16 = arith.constant 0 : index
    %c0_17 = arith.constant 0 : index
    %c0_18 = arith.constant 0 : index
    %18 = vector.load %arg8[%c0_16, %c0_17, %c0_18] : memref<1x12x128xbf16, #tpu.memory_space<vmem>>, vector<1x12x128xbf16>
    %19 = vector.shape_cast %18 : vector<1x12x128xbf16> to vector<12x128xbf16>
    %20 = vector.shape_cast %17 : vector<12x128xbf16> to vector<1x12x128xbf16>
    tpu.vector_store %arg8[%c0_16, %c0_17, %c0_18], %20 {strides = array<i32>} : memref<1x12x128xbf16, #tpu.memory_space<vmem>>, vector<1x12x128xbf16>,
    %21 = vector.broadcast %4 : vector<1x128xf32> to vector<24x128xf32>
    %22 = arith.mulf %16, %21 : vector<24x128xf32>
    %23 = arith.truncf %22 : vector<24x128xf32> to vector<24x128xbf16>
    %c0_19 = arith.constant 0 : index
    %c0_20 = arith.constant 0 : index
    %c0_21 = arith.constant 0 : index
    %24 = vector.load %arg9[%c0_19, %c0_20, %c0_21] : memref<1x24x128xbf16, #tpu.memory_space<vmem>>, vector<1x24x128xbf16>
    %25 = vector.shape_cast %24 : vector<1x24x128xbf16> to vector<24x128xbf16>
    %26 = vector.shape_cast %23 : vector<24x128xbf16> to vector<1x24x128xbf16>
    tpu.vector_store %arg9[%c0_19, %c0_20, %c0_21], %26 {strides = array<i32>} : memref<1x24x128xbf16, #tpu.memory_space<vmem>>, vector<1x24x128xbf16>,
    return
  }
  func.func @transform_0(%arg0: i32) -> (i32, i32, i32) {
    %c0_i32 = arith.constant 0 : i32
    %c0_i32_0 = arith.constant 0 : i32
    %c0_i32_1 = arith.constant 0 : i32
    return %arg0, %c0_i32, %c0_i32_0 : i32, i32, i32
  }
  func.func @transform_1(%arg0: i32) -> (i32, i32, i32) {
    %c0_i32 = arith.constant 0 : i32
    %c0_i32_0 = arith.constant 0 : i32
    %c0_i32_1 = arith.constant 0 : i32
    return %arg0, %c0_i32, %c0_i32_0 : i32, i32, i32
  }
  func.func @transform_2(%arg0: i32) -> (i32, i32) {
    %c0_i32 = arith.constant 0 : i32
    %c0_i32_0 = arith.constant 0 : i32
    %c0_i32_1 = arith.constant 0 : i32
    return %c0_i32, %c0_i32_0 : i32, i32
  }
  func.func @transform_3(%arg0: i32) -> (i32, i32) {
    %c0_i32 = arith.constant 0 : i32
    %c0_i32_0 = arith.constant 0 : i32
    %c0_i32_1 = arith.constant 0 : i32
    return %c0_i32, %c0_i32_0 : i32, i32
  }
  func.func @transform_4(%arg0: i32) -> (i32, i32) {
    %c0_i32 = arith.constant 0 : i32
    %c0_i32_0 = arith.constant 0 : i32
    %c0_i32_1 = arith.constant 0 : i32
    return %c0_i32, %c0_i32_0 : i32, i32
  }
  func.func @transform_5(%arg0: i32) -> (i32, i32) {
    %c0_i32 = arith.constant 0 : i32
    %c0_i32_0 = arith.constant 0 : i32
    %c0_i32_1 = arith.constant 0 : i32
    return %c0_i32, %c0_i32_0 : i32, i32
  }
  func.func @transform_6(%arg0: i32) -> (i32, i32) {
    %c0_i32 = arith.constant 0 : i32
    %c0_i32_0 = arith.constant 0 : i32
    %c0_i32_1 = arith.constant 0 : i32
    return %c0_i32, %c0_i32_0 : i32, i32
  }
  func.func @transform_7(%arg0: i32) -> (i32, i32, i32) {
    %c0_i32 = arith.constant 0 : i32
    %c0_i32_0 = arith.constant 0 : i32
    %c0_i32_1 = arith.constant 0 : i32
    return %arg0, %c0_i32, %c0_i32_0 : i32, i32, i32
  }
  func.func @transform_8(%arg0: i32) -> (i32, i32, i32) {
    %c0_i32 = arith.constant 0 : i32
    %c0_i32_0 = arith.constant 0 : i32
    %c0_i32_1 = arith.constant 0 : i32
    return %arg0, %c0_i32, %c0_i32_0 : i32, i32, i32
  }
}

</mosaic_0001>

<llo_original>
// kernel: tpu_custom_call.1
$region0: #{tpu_custom_call.1}
  #allocation0 [shape = 'u32[]', space=smem, size = 0x4, offset = 0x4, fixed_abs, tag = 'smem constant byte address 0x4 - core index']
  #allocation1 [shape = 'u32[144,128]{1,0:T(1,128)}', space=vmem, size = 0x12000, scoped, tag = 'internal scratch']
  %s0 = inlined_call_operand.vmem [shape: f32[2,12,128], index: 0, kind: input, shape index: {}]
  %s1 = inlined_call_operand.vmem [shape: f32[2,12,128], index: 1, kind: input, shape index: {}]
  %s2 = inlined_call_operand.vmem [shape: bf16[12,12], index: 2, kind: input, shape index: {}]
  %s3 = inlined_call_operand.vmem [shape: f32[12,1], index: 3, kind: input, shape index: {}]
  %s4 = inlined_call_operand.vmem [shape: bf16[24,12], index: 4, kind: input, shape index: {}]
  %s5 = inlined_call_operand.vmem [shape: f32[24,1], index: 5, kind: input, shape index: {}]
  %s6 = inlined_call_operand.vmem [shape: f32[1,128], index: 6, kind: input, shape index: {}]
  %s7 = inlined_call_operand.vmem [shape: bf16[2,12,128], index: 7, kind: output, shape index: {0}]
  %s8 = inlined_call_operand.hbm [shape: bf16[2,24,128], index: 8, kind: output, shape index: {1}]
  %9 = xla_tuple %s7, %s8
  %s10 = sld [smem:[#allocation0]]
  $region69: #{tpu_custom_call.1} parent=0
    _
  %s12 = ssub.s32 1, %s10
  %s13 = scalar_select 0, %s12, %s10
  $region1: #{tpu_custom_call.1} parent=0
    #allocation2 [shape = 'u8[12288]{0}', space=vmem, size = 0x3000, scoped, tag = 'output window, operand 1']
    #allocation3 [shape = 's32[2]{0}', space=sflag, size = 0x8, scoped, tag = 'scoped memory for tpu_custom_call.1']
    %14 = vsyncpa [#allocation3], 0
    %s15 = scalar_lea.sflag [#allocation3], 1
    %16 = vsyncpa %s15, 0
    loop: start=0, step=1, limit=4
    $region2: #{tpu_custom_call.1} parent=1 // loop_pre_header
      _
    $region3: #{tpu_custom_call.1} parent=1 // loop_header
      %s18 = sphi 0, %s22
      %p19 = scmp.ge.s32.totalorder %s18, 4
      %s28 = sphi 0, %s30
      %s31 = sphi 0, %s28
      %s32 = sphi 0, %s31
      %s48 = sphi 0, %s32
      %s54 = sphi 0, %s56
      %s57 = sphi 0, %s54
      %s58 = sphi 0, %s57
      %s74 = sphi 0, %s58
      %s78 = sphi 0, %s78
      %s80 = sphi 0, %s78
      %s81 = sphi 0, %s80
      %s95 = sphi 0, %s81
      %s99 = sphi 0, %s99
      %s101 = sphi 0, %s99
      %s102 = sphi 0, %s101
      %s116 = sphi 0, %s102
      %s120 = sphi 0, %s120
      %s122 = sphi 0, %s120
      %s123 = sphi 0, %s122
      %s137 = sphi 0, %s123
      %s141 = sphi 0, %s141
      %s143 = sphi 0, %s141
      %s144 = sphi 0, %s143
      %s158 = sphi 0, %s144
      %s162 = sphi 0, %s162
      %s164 = sphi 0, %s162
      %s165 = sphi 0, %s164
      %s179 = sphi 0, %s165
      %s185 = sphi 0, %s187
      %s188 = sphi 0, %s185
      %s189 = sphi 0, %s188
      %s205 = sphi 0, %s189
      %s211 = sphi 0, %s213
      %s214 = sphi 0, %s211
      %s215 = sphi 0, %s214
      %s231 = sphi 0, %s215
    $region4: #{tpu_custom_call.1} parent=1 // loop_header_branch
      %21 = sbr.rel (%p19) target = $region8
    $region5: #{tpu_custom_call.1} parent=1 // loop_body
      %s23 = ssub.s32 %s18, 1
      %s24 = ssub.s32 %s18, 2
      %s25 = sadd.s32 %s18, 1
      %s26 = ssub.s32 %s18, %s25
      %p27 = scmp.eq.s32.totalorder %s26, 0
      %s29 = sadd.s32 %s28, 1
      %s30 = scalar_select %p27, %s28, %s29
      %p33 = pneg %p27
      %p34 = scmp.eq.s32.totalorder %s18, 1
      %p35 = por %p33, %p34
      %p36 = scmp.ne.s32.totalorder %s28, %s31
      %p37 = scmp.eq.s32.totalorder %s18, 0
      %p38 = por %p36, %p37
      %p39 = scmp.ne.s32.totalorder %s28, %s31
      %p40 = scmp.eq.s32.totalorder %s23, 1
      %p41 = por %p39, %p40
      %p42 = scmp.ne.s32.totalorder %s31, %s32
      %p43 = scmp.eq.s32.totalorder %s23, 0
      %p44 = por %p42, %p43
      %p45 = scmp.ne.s32.totalorder %s31, %s32
      %p46 = scmp.eq.s32.totalorder %s24, 1
      %p47 = por %p45, %p46
      %p49 = scmp.ne.s32.totalorder %s32, %s48
      %p50 = scmp.eq.s32.totalorder %s24, 0
      %p51 = por %p49, %p50
      %s52 = ssub.s32 %s18, %s25
      %p53 = scmp.eq.s32.totalorder %s52, 0
      %s55 = sadd.s32 %s54, 1
      %s56 = scalar_select %p53, %s54, %s55
      %p59 = pneg %p53
      %p60 = scmp.eq.s32.totalorder %s18, 1
      %p61 = por %p59, %p60
      %p62 = scmp.ne.s32.totalorder %s54, %s57
      %p63 = scmp.eq.s32.totalorder %s18, 0
      %p64 = por %p62, %p63
      %p65 = scmp.ne.s32.totalorder %s54, %s57
      %p66 = scmp.eq.s32.totalorder %s23, 1
      %p67 = por %p65, %p66
      %p68 = scmp.ne.s32.totalorder %s57, %s58
      %p69 = scmp.eq.s32.totalorder %s23, 0
      %p70 = por %p68, %p69
      %p71 = scmp.ne.s32.totalorder %s57, %s58
      %p72 = scmp.eq.s32.totalorder %s24, 1
      %p73 = por %p71, %p72
      %p75 = scmp.ne.s32.totalorder %s58, %s74
      %p76 = scmp.eq.s32.totalorder %s24, 0
      %p77 = por %p75, %p76
      %s79 = sadd.s32 %s78, 1
      %p82 = scmp.eq.s32.totalorder %s18, 1
      %p83 = scmp.ne.s32.totalorder %s78, %s80
      %p84 = scmp.eq.s32.totalorder %s18, 0
      %p85 = por %p83, %p84
      %p86 = scmp.ne.s32.totalorder %s78, %s80
      %p87 = scmp.eq.s32.totalorder %s23, 1
      %p88 = por %p86, %p87
      %p89 = scmp.ne.s32.totalorder %s80, %s81
      %p90 = scmp.eq.s32.totalorder %s23, 0
      %p91 = por %p89, %p90
      %p92 = scmp.ne.s32.totalorder %s80, %s81
      %p93 = scmp.eq.s32.totalorder %s24, 1
      %p94 = por %p92, %p93
      %p96 = scmp.ne.s32.totalorder %s81, %s95
      %p97 = scmp.eq.s32.totalorder %s24, 0
      %p98 = por %p96, %p97
      %s100 = sadd.s32 %s99, 1
      %p103 = scmp.eq.s32.totalorder %s18, 1
      %p104 = scmp.ne.s32.totalorder %s99, %s101
      %p105 = scmp.eq.s32.totalorder %s18, 0
      %p106 = por %p104, %p105
      %p107 = scmp.ne.s32.totalorder %s99, %s101
      %p108 = scmp.eq.s32.totalorder %s23, 1
      %p109 = por %p107, %p108
      %p110 = scmp.ne.s32.totalorder %s101, %s102
      %p111 = scmp.eq.s32.totalorder %s23, 0
      %p112 = por %p110, %p111
      %p113 = scmp.ne.s32.totalorder %s101, %s102
      %p114 = scmp.eq.s32.totalorder %s24, 1
      %p115 = por %p113, %p114
      %p117 = scmp.ne.s32.totalorder %s102, %s116
      %p118 = scmp.eq.s32.totalorder %s24, 0
      %p119 = por %p117, %p118
      %s121 = sadd.s32 %s120, 1
      %p124 = scmp.eq.s32.totalorder %s18, 1
      %p125 = scmp.ne.s32.totalorder %s120, %s122
      %p126 = scmp.eq.s32.totalorder %s18, 0
      %p127 = por %p125, %p126
      %p128 = scmp.ne.s32.totalorder %s120, %s122
      %p129 = scmp.eq.s32.totalorder %s23, 1
      %p130 = por %p128, %p129
      %p131 = scmp.ne.s32.totalorder %s122, %s123
      %p132 = scmp.eq.s32.totalorder %s23, 0
      %p133 = por %p131, %p132
      %p134 = scmp.ne.s32.totalorder %s122, %s123
      %p135 = scmp.eq.s32.totalorder %s24, 1
      %p136 = por %p134, %p135
      %p138 = scmp.ne.s32.totalorder %s123, %s137
      %p139 = scmp.eq.s32.totalorder %s24, 0
      %p140 = por %p138, %p139
      %s142 = sadd.s32 %s141, 1
      %p145 = scmp.eq.s32.totalorder %s18, 1
      %p146 = scmp.ne.s32.totalorder %s141, %s143
      %p147 = scmp.eq.s32.totalorder %s18, 0
      %p148 = por %p146, %p147
      %p149 = scmp.ne.s32.totalorder %s141, %s143
      %p150 = scmp.eq.s32.totalorder %s23, 1
      %p151 = por %p149, %p150
      %p152 = scmp.ne.s32.totalorder %s143, %s144
      %p153 = scmp.eq.s32.totalorder %s23, 0
      %p154 = por %p152, %p153
      %p155 = scmp.ne.s32.totalorder %s143, %s144
      %p156 = scmp.eq.s32.totalorder %s24, 1
      %p157 = por %p155, %p156
      %p159 = scmp.ne.s32.totalorder %s144, %s158
      %p160 = scmp.eq.s32.totalorder %s24, 0
      %p161 = por %p159, %p160
      %s163 = sadd.s32 %s162, 1
      %p166 = scmp.eq.s32.totalorder %s18, 1
      %p167 = scmp.ne.s32.totalorder %s162, %s164
      %p168 = scmp.eq.s32.totalorder %s18, 0
      %p169 = por %p167, %p168
      %p170 = scmp.ne.s32.totalorder %s162, %s164
      %p171 = scmp.eq.s32.totalorder %s23, 1
      %p172 = por %p170, %p171
      %p173 = scmp.ne.s32.totalorder %s164, %s165
      %p174 = scmp.eq.s32.totalorder %s23, 0
      %p175 = por %p173, %p174
      %p176 = scmp.ne.s32.totalorder %s164, %s165
      %p177 = scmp.eq.s32.totalorder %s24, 1
      %p178 = por %p176, %p177
      %p180 = scmp.ne.s32.totalorder %s165, %s179
      %p181 = scmp.eq.s32.totalorder %s24, 0
      %p182 = por %p180, %p181
      %s183 = ssub.s32 %s18, %s25
      %p184 = scmp.eq.s32.totalorder %s183, 0
      %s186 = sadd.s32 %s185, 1
      %s187 = scalar_select %p184, %s185, %s186
      %p190 = pneg %p184
      %p191 = scmp.eq.s32.totalorder %s18, 1
      %p192 = por %p190, %p191
      %p193 = scmp.ne.s32.totalorder %s185, %s188
      %p194 = scmp.eq.s32.totalorder %s18, 0
      %p195 = por %p193, %p194
      %p196 = scmp.ne.s32.totalorder %s185, %s188
      %p197 = scmp.eq.s32.totalorder %s23, 1
      %p198 = por %p196, %p197
      %p199 = scmp.ne.s32.totalorder %s188, %s189
      %p200 = scmp.eq.s32.totalorder %s23, 0
      %p201 = por %p199, %p200
      %p202 = scmp.ne.s32.totalorder %s188, %s189
      %p203 = scmp.eq.s32.totalorder %s24, 1
      %p204 = por %p202, %p203
      %p206 = scmp.ne.s32.totalorder %s189, %s205
      %p207 = scmp.eq.s32.totalorder %s24, 0
      %p208 = por %p206, %p207
      %s209 = ssub.s32 %s18, %s25
      %p210 = scmp.eq.s32.totalorder %s209, 0
      %s212 = sadd.s32 %s211, 1
      %s213 = scalar_select %p210, %s211, %s212
      %p216 = pneg %p210
      %p217 = scmp.eq.s32.totalorder %s18, 1
      %p218 = por %p216, %p217
      %p219 = scmp.ne.s32.totalorder %s211, %s214
      %p220 = scmp.eq.s32.totalorder %s18, 0
      %p221 = por %p219, %p220
      %p222 = scmp.ne.s32.totalorder %s211, %s214
      %p223 = scmp.eq.s32.totalorder %s23, 1
      %p224 = por %p222, %p223
      %p225 = scmp.ne.s32.totalorder %s214, %s215
      %p226 = scmp.eq.s32.totalorder %s23, 0
      %p227 = por %p225, %p226
      %p228 = scmp.ne.s32.totalorder %s214, %s215
      %p229 = scmp.eq.s32.totalorder %s24, 1
      %p230 = por %p228, %p229
      %p232 = scmp.ne.s32.totalorder %s215, %s231
      %p233 = scmp.eq.s32.totalorder %s24, 0
      %p234 = por %p232, %p233
      %p235 = scmp.le.s32.totalorder 1, %s18
      %p236 = scmp.lt.s32.totalorder %s18, 3
      %p237 = pnand %p235, %p236
      %p238 = pneg %p237
      // Predicated region
      $region9: #{tpu_custom_call.1} parent=5 // pred_check
        _
      $region10: #{tpu_custom_call.1} parent=5 // pred_check_branch
        %240 = sbr.rel (%p237) target = $region12
      $region11: #{tpu_custom_call.1} parent=5 // pred_region
        %s241 = ssub.s32 %s18, 1
        // Predicated region
        $region13: #{tpu_custom_call.1} parent=11 // pred_check
          %p242 = pneg %p91
        $region14: #{tpu_custom_call.1} parent=11 // pred_check_branch
          %244 = sbr.rel (%p242) target = $region16
        $region15: #{tpu_custom_call.1} parent=11 // pred_region
          _
        $region16: #{tpu_custom_call.1} parent=11 // pred_fallthru
          _
        // Predicated region
        $region17: #{tpu_custom_call.1} parent=11 // pred_check
          %p245 = pneg %p112
        $region18: #{tpu_custom_call.1} parent=11 // pred_check_branch
          %247 = sbr.rel (%p245) target = $region20
        $region19: #{tpu_custom_call.1} parent=11 // pred_region
          _
        $region20: #{tpu_custom_call.1} parent=11 // pred_fallthru
          _
        // Predicated region
        $region21: #{tpu_custom_call.1} parent=11 // pred_check
          %p248 = pneg %p133
        $region22: #{tpu_custom_call.1} parent=11 // pred_check_branch
          %250 = sbr.rel (%p248) target = $region24
        $region23: #{tpu_custom_call.1} parent=11 // pred_region
          _
        $region24: #{tpu_custom_call.1} parent=11 // pred_fallthru
          _
        // Predicated region
        $region25: #{tpu_custom_call.1} parent=11 // pred_check
          %p251 = pneg %p154
        $region26: #{tpu_custom_call.1} parent=11 // pred_check_branch
          %253 = sbr.rel (%p251) target = $region28
        $region27: #{tpu_custom_call.1} parent=11 // pred_region
          _
        $region28: #{tpu_custom_call.1} parent=11 // pred_fallthru
          _
        // Predicated region
        $region29: #{tpu_custom_call.1} parent=11 // pred_check
          %p254 = pneg %p175
        $region30: #{tpu_custom_call.1} parent=11 // pred_check_branch
          %256 = sbr.rel (%p254) target = $region32
        $region31: #{tpu_custom_call.1} parent=11 // pred_region
          _
        $region32: #{tpu_custom_call.1} parent=11 // pred_fallthru
          _
      $region12: #{tpu_custom_call.1} parent=5 // pred_fallthru
        _
      %p257 = scmp.lt.s32.totalorder %s18, 2
      // Predicated region
      $region33: #{tpu_custom_call.1} parent=5 // pred_check
        %p258 = pneg %p257
      $region34: #{tpu_custom_call.1} parent=5 // pred_check_branch
        %260 = sbr.rel (%p258) target = $region36
      $region35: #{tpu_custom_call.1} parent=5 // pred_region
        // Predicated region
        $region37: #{tpu_custom_call.1} parent=35 // pred_check
          %p261 = pneg %p38
        $region38: #{tpu_custom_call.1} parent=35 // pred_check_branch
          %263 = sbr.rel (%p261) target = $region40
        $region39: #{tpu_custom_call.1} parent=35 // pred_region
          %p264 = scmp.lt.s32.totalorder %s18, 1
          %s265 = scalar_select %p264, %s18, 1
          %s266 = smul.addr %s265, 2
          %s267 = smul.addr %s266, 8
          %s268 = scalar_lea.vmem %s0, %s267
        $region40: #{tpu_custom_call.1} parent=35 // pred_fallthru
          _
        // Predicated region
        $region41: #{tpu_custom_call.1} parent=35 // pred_check
          %p269 = pneg %p64
        $region42: #{tpu_custom_call.1} parent=35 // pred_check_branch
          %271 = sbr.rel (%p269) target = $region44
        $region43: #{tpu_custom_call.1} parent=35 // pred_region
          %p272 = scmp.lt.s32.totalorder %s18, 1
          %s273 = scalar_select %p272, %s18, 1
          %s274 = smul.addr %s273, 2
          %s275 = smul.addr %s274, 8
          %s276 = scalar_lea.vmem %s1, %s275
        $region44: #{tpu_custom_call.1} parent=35 // pred_fallthru
          _
      $region36: #{tpu_custom_call.1} parent=5 // pred_fallthru
        _
      %p277 = scmp.le.s32.totalorder 1, %s18
      %p278 = scmp.lt.s32.totalorder %s18, 3
      %p279 = pnand %p277, %p278
      %p280 = pneg %p279
      // Predicated region
      $region45: #{tpu_custom_call.1} parent=5 // pred_check
        _
      $region46: #{tpu_custom_call.1} parent=5 // pred_check_branch
        %282 = sbr.rel (%p279) target = $region48
      $region47: #{tpu_custom_call.1} parent=5 // pred_region
        %s283 = ssub.s32 %s18, 1
        %p284 = scmp.lt.s32.totalorder %s23, 1
        %s285 = scalar_select %p284, %s23, 1
        %s286 = smul.addr %s285, 2
        %s287 = smul.addr %s286, 8
        %s288 = scalar_lea.vmem %s0, %s287
        %p289 = pneg %p44
        %p290 = pneg %p41
        %p291 = scmp.lt.s32.totalorder %s23, 1
        %s292 = scalar_select %p291, %s23, 1
        %s293 = smul.addr %s292, 2
        %s294 = smul.addr %s293, 8
        %s295 = scalar_lea.vmem %s1, %s294
        %p296 = pneg %p70
        %p297 = pneg %p67
        %p298 = pneg %p91
        %p299 = pneg %p88
        %p300 = pneg %p112
        %p301 = pneg %p109
        %p302 = pneg %p133
        %p303 = pneg %p130
        %p304 = pneg %p154
        %p305 = pneg %p151
        %p306 = pneg %p175
        %p307 = pneg %p172
        %p308 = pneg %p201
        %p309 = pneg %p198
        %p310 = scmp.lt.s32.totalorder %s23, 1
        %s311 = scalar_select %p310, %s23, 1
        %s312 = smul.addr %s311, 2
        %s313 = smul.addr %s312, 4
        %s314 = scalar_lea.vmem %s7, %s313
        %p315 = pneg %p227
        %p316 = pneg %p224
        %s317 = sand.u32 %s214, 1
        %s318 = scalar_lea.sflag [#allocation3], %s317
        %s319 = sand.u32 %s214, 1
        %s320 = smul.addr %s319, 12
        %s321 = scalar_lea.vmem [#allocation2], %s320
        %p322 = scmp.lt.s32.totalorder %s23, 1
        %s323 = scalar_select %p322, %s23, 1
        %s324 = smul.addr %s323, 2
        %s325 = smul.addr %s324, 8
        %s326 = scalar_lea.vmem %s0, %s325
        %p327 = scmp.lt.s32.totalorder %s23, 1
        %s328 = scalar_select %p327, %s23, 1
        %s329 = smul.addr %s328, 2
        %s330 = smul.addr %s329, 8
        %s331 = scalar_lea.vmem %s1, %s330
        %p332 = scmp.lt.s32.totalorder %s23, 1
        %s333 = scalar_select %p332, %s23, 1
        %s334 = smul.addr %s333, 2
        %s335 = smul.addr %s334, 4
        %s336 = scalar_lea.vmem %s7, %s335
        %v338 = vld [vmem:[%s2] sm:$0xf]
        %v339 = vld [vmem:[%s2 + $0x4] sm:$0x3]
        %v340 = vld [vmem:[%s3] sm:$0xff]
        %v341 = vld [vmem:[%s3 + $0x8] sm:$0xf]
        %v342 = vld [vmem:[%s4] sm:$0xf]
        %v343 = vld [vmem:[%s4 + $0x4] sm:$0xf]
        %v344 = vld [vmem:[%s4 + $0x8] sm:$0xf]
        %v345 = vld [vmem:[%s5] sm:$0xff]
        %v346 = vld [vmem:[%s5 + $0x8] sm:$0xff]
        %v347 = vld [vmem:[%s5 + $0x10] sm:$0xff]
        %v348 = vld [vmem:[%s6] sm:$0x1]
        %v349 = vld [vmem:[%s326] sm:$0xff]
        %v350 = vld [vmem:[%s326 + $0x8] sm:$0xf]
        %v351 = vpack.c.bf16 %v350, %v349
        %v352 = vld [vmem:[%s331] sm:$0xff]
        %v353 = vld [vmem:[%s331 + $0x8] sm:$0xf]
        %v354 = vpack.c.bf16 %v353, %v352
        %356 = vset.pattern.permute.xlu0 0
        %357 = vperm.xlu0 %356, %v340
        %v358 = vpop.permute.xlu0 %357
        %361 = vset.pattern.permute.xlu0 0
        %362 = vperm.xlu0 %361, %v341
        %v363 = vpop.permute.xlu0 %362
        %v367 = vunpack.c.l.b16 %v338
        %v368 = vunpack.c.l.b16 %v339
        %v369 = vpack.c.b16 %v368, %v367
        %vm370 = vcmask 97280
        %v372 = vsel %vm370, %v369, 0
        %vm374 = vcmask 1045504
        %v376 = vsel %vm374, %v351, 0
        %378 = vmatprep.subr.bf16.mxu0 0
        %379 = vmatpush1.bf16.msra.mxu0 0
        %380 = vmatprep.subr.bf16.mxu0 0
        %381 = vmatpush1.bf16.msra.mxu0 0
        %382 = vmatprep.subr.bf16.mxu0 0
        %383 = vmatpush1.bf16.msra.mxu0 0
        %384 = vmatprep.subr.bf16.mxu0 0
        %385 = vmatpush1.bf16.msra.mxu0 0
        %386 = vmatprep.subr.bf16.mxu0 0
        %387 = vmatpush1.bf16.msra.mxu0 0
        %388 = vmatprep.subr.bf16.mxu0 0
        %389 = vmatpush1.bf16.msra.mxu0 0
        %390 = vmatprep.subr.bf16.mxu0 0
        %391 = vmatpush1.bf16.msra.mxu0 0
        %392 = vmatprep.subr.bf16.mxu0 0
        %393 = vmatpush1.bf16.msra.mxu0 %v376
        %394 = vmatprep.subr.bf16.mxu0 0
        %395 = vmatpush2.bf16.msra.mxu0 0
        %396 = vmatprep.subr.bf16.mxu0 0
        %397 = vmatpush2.bf16.msra.mxu0 0
        %398 = vmatprep.subr.bf16.mxu0 0
        %399 = vmatpush2.bf16.msra.mxu0 0
        %400 = vmatprep.subr.bf16.mxu0 0
        %401 = vmatpush2.bf16.msra.mxu0 0
        %402 = vmatprep.subr.bf16.mxu0 0
        %403 = vmatpush2.bf16.msra.mxu0 0
        %404 = vmatprep.subr.bf16.mxu0 0
        %405 = vmatpush2.bf16.msra.mxu0 0
        %406 = vmatprep.subr.bf16.mxu0 0
        %407 = vmatpush2.bf16.msra.mxu0 0
        %408 = vmatprep.subr.bf16.mxu0 0
        %409 = vmatpush2.bf16.msra.mxu0 0
        %410 = vmatprep.mubr.bf16.mxu0 0
        %411 = vmatmul.mubr.bf16.gmra.mxu0 %v372
        %v412 = vpop.f32.mrf.mxu0
        %v413 = vadd.f32 %v358, %v412
        %v414 = vpop.f32.mrf.mxu0
        %v415 = vpop.f32.mrf.mxu0
        %v416 = vadd.f32 %v363, %v415
        %v417 = vpop.f32.mrf.mxu0
        %418 = vdwg.mxu0
        %420 = vset.pattern.permute.xlu0 0
        %421 = vperm.xlu0 %420, %v345
        %v422 = vpop.permute.xlu0 %421
        %425 = vset.pattern.permute.xlu0 0
        %426 = vperm.xlu0 %425, %v346
        %v427 = vpop.permute.xlu0 %426
        %430 = vset.pattern.permute.xlu0 0
        %431 = vperm.xlu0 %430, %v347
        %v432 = vpop.permute.xlu0 %431
        %v437 = vunpack.c.l.b16 %v342
        %v438 = vunpack.c.l.b16 %v343
        %v439 = vunpack.c.l.b16 %v344
        %v440 = vpack.c.b16 %v438, %v437
        %v441 = vpack.c.b16 %v439, %v439
        %v443 = vsel %vm370, %v440, 0
        %v446 = vsel %vm370, %v441, 0
        %v449 = vsel %vm374, %v354, 0
        %451 = vmatprep.subr.bf16.mxu0 0
        %452 = vmatpush1.bf16.msra.mxu0 0
        %453 = vmatprep.subr.bf16.mxu0 0
        %454 = vmatpush1.bf16.msra.mxu0 0
        %455 = vmatprep.subr.bf16.mxu0 0
        %456 = vmatpush1.bf16.msra.mxu0 0
        %457 = vmatprep.subr.bf16.mxu0 0
        %458 = vmatpush1.bf16.msra.mxu0 0
        %459 = vmatprep.subr.bf16.mxu0 0
        %460 = vmatpush1.bf16.msra.mxu0 0
        %461 = vmatprep.subr.bf16.mxu0 0
        %462 = vmatpush1.bf16.msra.mxu0 0
        %463 = vmatprep.subr.bf16.mxu0 0
        %464 = vmatpush1.bf16.msra.mxu0 0
        %465 = vmatprep.subr.bf16.mxu0 0
        %466 = vmatpush1.bf16.msra.mxu0 %v449
        %467 = vmatprep.subr.bf16.mxu0 0
        %468 = vmatpush2.bf16.msra.mxu0 0
        %469 = vmatprep.subr.bf16.mxu0 0
        %470 = vmatpush2.bf16.msra.mxu0 0
        %471 = vmatprep.subr.bf16.mxu0 0
        %472 = vmatpush2.bf16.msra.mxu0 0
        %473 = vmatprep.subr.bf16.mxu0 0
        %474 = vmatpush2.bf16.msra.mxu0 0
        %475 = vmatprep.subr.bf16.mxu0 0
        %476 = vmatpush2.bf16.msra.mxu0 0
        %477 = vmatprep.subr.bf16.mxu0 0
        %478 = vmatpush2.bf16.msra.mxu0 0
        %479 = vmatprep.subr.bf16.mxu0 0
        %480 = vmatpush2.bf16.msra.mxu0 0
        %481 = vmatprep.subr.bf16.mxu0 0
        %482 = vmatpush2.bf16.msra.mxu0 0
        %483 = vmatprep.mubr.bf16.mxu0 0
        %484 = vmatmul.mubr.bf16.gmra.mxu0 %v443
        %v485 = vpop.f32.mrf.mxu0
        %v486 = vadd.f32 %v422, %v485
        %v487 = vpop.f32.mrf.mxu0
        %v488 = vpop.f32.mrf.mxu0
        %v489 = vadd.f32 %v427, %v488
        %v490 = vpop.f32.mrf.mxu0
        %491 = vmatprep.mubr.bf16.mxu0 0
        %492 = vmatmul.mubr.bf16.gmra.mxu0 %v446
        %v493 = vpop.f32.mrf.mxu0
        %v494 = vadd.f32 %v432, %v493
        %v495 = vpop.f32.mrf.mxu0
        %v496 = vpop.f32.mrf.mxu0
        %v497 = vpop.f32.mrf.mxu0
        %498 = vdwg.mxu0
        %v499 = vpack.c.bf16 %v416, %v413
        %v501 = vunpack.c.l.b16 %v499
        %v502 = vunpack.c.h.b16 %v499
        %v503 = vpack.c.b16 %v501, %v501
        %v504 = vpack.c.b16 %v502, %v502
        %507 = vst [vmem:[%s336] sm:$0xf] %v503
        %508 = vst [vmem:[%s336 + $0x4] sm:$0x3] %v504
        %v510 = vlaneseq
        %v511 = vshrl.u32 %v510, 7
        %v512 = vsub.s32 0, %v511
        %v513 = vrot.slane %v348, %v512
        %v515 = vmul.f32 %v486, %v513
        %v516 = vmul.f32 %v489, %v513
        %v517 = vmul.f32 %v494, %v513
        %v518 = vpack.c.bf16 %v516, %v515
        %v519 = vpack.c.bf16 %v517, %v517
        %v522 = vunpack.c.l.b16 %v518
        %v523 = vunpack.c.h.b16 %v518
        %v524 = vunpack.c.l.b16 %v519
        %v525 = vpack.c.b16 %v522, %v522
        %v526 = vpack.c.b16 %v523, %v523
        %v527 = vpack.c.b16 %v524, %v524
        %531 = vst [vmem:[%s321] sm:$0xf] %v525
        %532 = vst [vmem:[%s321 + $0x4] sm:$0xf] %v526
        %533 = vst [vmem:[%s321 + $0x8] sm:$0xf] %v527
        %p534 = scmp.lt.s32.totalorder %s23, 1
        %s535 = scalar_select %p534, %s23, 1
        %s536 = smul.addr %s535, 2
        %s537 = smul.addr %s536, 4
        %s538 = scalar_lea.vmem %s7, %s537
        %s539 = sand.u32 %s214, 1
        %s540 = scalar_lea.sflag [#allocation3], %s539
        %s541 = sand.u32 %s214, 1
        %s542 = smul.addr %s541, 12
        %s543 = scalar_lea.vmem [#allocation2], %s542
        // Predicated region
        $region49: #{tpu_custom_call.1} parent=47 // pred_check
          %p544 = pneg %p198
        $region50: #{tpu_custom_call.1} parent=47 // pred_check_branch
          %546 = sbr.rel (%p544) target = $region52
        $region51: #{tpu_custom_call.1} parent=47 // pred_region
          _
        $region52: #{tpu_custom_call.1} parent=47 // pred_fallthru
          _
        // Predicated region
        $region53: #{tpu_custom_call.1} parent=47 // pred_check
          %p547 = pneg %p224
        $region54: #{tpu_custom_call.1} parent=47 // pred_check_branch
          %549 = sbr.rel (%p547) target = $region56
        $region55: #{tpu_custom_call.1} parent=47 // pred_region
          %s551 = ssub.s32 192, 192
          %552 = vsyncadd %s540, %s551
          %s553 = smul.addr %s23, 3
          %s554 = smul.addr %s553, 64
          %s555 = scalar_lea.hbm %s8, %s554
          %s556 = sshll.u32 %s543, 4
          %s557 = int_to_ptr.vmem [resolvable:$true] %s556
          %562 = dma.vmem_to_hbm [thread:$0]  %s557, 192, %s555, %s540, 64, 64, 4
        $region56: #{tpu_custom_call.1} parent=47 // pred_fallthru
          _
      $region48: #{tpu_custom_call.1} parent=5 // pred_fallthru
        _
      %p563 = scmp.le.s32.totalorder 2, %s18
      // Predicated region
      $region57: #{tpu_custom_call.1} parent=5 // pred_check
        %p564 = pneg %p563
      $region58: #{tpu_custom_call.1} parent=5 // pred_check_branch
        %566 = sbr.rel (%p564) target = $region60
      $region59: #{tpu_custom_call.1} parent=5 // pred_region
        %s567 = ssub.s32 %s18, 2
        // Predicated region
        $region61: #{tpu_custom_call.1} parent=59 // pred_check
          %p568 = pneg %p204
        $region62: #{tpu_custom_call.1} parent=59 // pred_check_branch
          %570 = sbr.rel (%p568) target = $region64
        $region63: #{tpu_custom_call.1} parent=59 // pred_region
          %p571 = scmp.lt.s32.totalorder %s24, 1
          %s572 = scalar_select %p571, %s24, 1
          %s573 = smul.addr %s572, 2
          %s574 = smul.addr %s573, 4
          %s575 = scalar_lea.vmem %s7, %s574
        $region64: #{tpu_custom_call.1} parent=59 // pred_fallthru
          _
        // Predicated region
        $region65: #{tpu_custom_call.1} parent=59 // pred_check
          %p576 = pneg %p230
        $region66: #{tpu_custom_call.1} parent=59 // pred_check_branch
          %578 = sbr.rel (%p576) target = $region68
        $region67: #{tpu_custom_call.1} parent=59 // pred_region
          %s579 = sand.u32 %s215, 1
          %s580 = scalar_lea.sflag [#allocation3], %s579
          %s581 = sand.u32 %s215, 1
          %s582 = smul.addr %s581, 12
          %s583 = scalar_lea.vmem [#allocation2], %s582
          %584 = dma.done %s580, 192
        $region68: #{tpu_custom_call.1} parent=59 // pred_fallthru
          _
      $region60: #{tpu_custom_call.1} parent=5 // pred_fallthru
        _
    $region6: #{tpu_custom_call.1} parent=1 // loop_footer
      %s22 = sadd.s32 1, %s18
    $region7: #{tpu_custom_call.1} parent=1 // loop_footer_branch
      %17 = sbr.rel target = $region3
    $region8: #{tpu_custom_call.1} parent=1 // loop_exit
      _
    %585 = vsyncpa [#allocation3], 1
    %s586 = scalar_lea.sflag [#allocation3], 1
    %587 = vsyncpa %s586, 1

</llo_original>
